<compile_context>
chip_gen: v7x
topology: tpu7x:2x2x1
jax: 0.10.0
libtpu: 0.0.40
codegen_flags: <defaults>
</compile_context>

<pallas_src>
import functools

import numpy as np

import jax
import jax.numpy as jnp
from jax.experimental import pallas as pl
from jax.experimental.pallas import tpu as pltpu


def _alibi_add_kernel(att_ref, out_ref, *, n_heads: int):
    bn, tr, t = att_ref.shape
    base_slice = pl.program_id(0) * bn      # first (batch*head) slice in block
    base_row = pl.program_id(1) * tr        # first attention row in block

    # Per-slice ALiBi slope: slice s has head h = s % n_heads and
    # scale = 1 / ((h + 1)^2 * 8).  Built from an in-kernel iota (no captured
    # constants).
    local = jax.lax.broadcasted_iota(jnp.int32, (bn, 1, 1), 0)
    h = (base_slice + local) % n_heads
    hp1 = (h + 1).astype(jnp.float32)
    scale = 1.0 / (hp1 * hp1 * 8.0)                               # (bn, 1, 1)

    # rel[i, j] = j - (i + base_row), computed once per block; the bias is then
    # a single fused multiply rel * scale (better precision than
    # j*scale - i*scale, same ~2 VPU ops/element).
    col = jax.lax.broadcasted_iota(jnp.int32, (tr, t), 1)
    row = jax.lax.broadcasted_iota(jnp.int32, (tr, t), 0) + base_row
    rel = (col - row).astype(jnp.float32)                         # (tr, t)

    # Read native dtype, compute in f32, cast once at the store.
    att = att_ref[...].astype(jnp.float32)
    out_ref[...] = (att + rel[None] * scale).astype(out_ref.dtype)


def _vmem_capacity_bytes() -> int:
    try:
        return int(pltpu.get_tpu_info().vmem_capacity_bytes)
    except Exception:
        return 64 << 20          # conservative (v7x per-TC) fallback


def _choose_tiles(n: int, t: int, in_item: int, out_item: int,
                  budget: int, sublane: int):
    """Pick (slices_per_block, rows_per_block); grid uses cdiv so no divisor
    constraints — ragged edge blocks are masked by Pallas."""
    per_row = t * (in_item + out_item)
    per_slice = t * per_row
    if per_slice <= budget:
        bn = int(min(n, max(1, budget // per_slice)))
        return bn, t
    # A single (1, T, T) slice is too big: tile rows at sublane granularity.
    tr = int(min(t, max(sublane, (budget // per_row) // sublane * sublane)))
    return 1, tr


def _ensure_two_blocks(n: int, t: int, bn: int, tr: int, sublane: int):
    """v7x has 2 TensorCores; a 1-step grid leaves one idle."""
    if pl.cdiv(n, bn) * pl.cdiv(t, tr) >= 2:
        return bn, tr
    if bn > 1:
        return (bn + 1) // 2, tr
    half = (tr // 2) // sublane * sublane
    if half >= sublane:
        return bn, half
    return bn, tr                # problem too small to split further


def alibi_encoding_forward(attention: jax.Array, n_heads: int,
                           max_seq_length: int) -> jax.Array:
    """Pallas equivalent of AlibiEncoding.forward.

    attention: (..., T, T); flattened leading dims must be a multiple of
               n_heads and (batch, n_heads)-major (flat slice s uses head
               s % n_heads — the PyTorch view(-1, n_heads, t, t) convention).
    returns:   (-1, T, T) in promote_types(attention.dtype, float32).
    """
    t1, t2 = attention.shape[-2:]
    assert t1 == t2, "attention must be square"
    assert t1 <= max_seq_length, "attention must be smaller than max_seq_length"

    att = attention.reshape(-1, t1, t1)   # free reshape; dtype handled in-kernel
    n = att.shape[0]
    assert n % n_heads == 0, "leading dims must be a multiple of n_heads"

    out_dtype = jnp.promote_types(att.dtype, jnp.float32)
    in_item = np.dtype(att.dtype).itemsize
    out_item = np.dtype(out_dtype).itemsize

    # Generation-aware block budget: big blocks hide the ~0.35 us/step cost
    # (v7x 3.2 TB/s HBM needs the biggest), bounded by per-TC VMEM.
    vmem_cap = _vmem_capacity_bytes()
    budget = (14 << 20) if vmem_cap <= (64 << 20) else (28 << 20)

    # Sub-32-bit inputs pack along sublanes; keep the row tile packed-aligned.
    sublane = max(8, 8 * (4 // max(1, in_item)))

    bn, tr = _choose_tiles(n, t1, in_item, out_item, budget, sublane)
    bn, tr = _ensure_two_blocks(n, t1, bn, tr, sublane)

    block_bytes = bn * tr * t1 * (in_item + out_item)
    vmem_limit = max(32 << 20, 2 * block_bytes + (2 << 20))   # double-buffered
    vmem_limit = int(min(vmem_limit, vmem_cap - (8 << 20)))

    grid = (pl.cdiv(n, bn), pl.cdiv(t1, tr))

    cost = pl.CostEstimate(
        flops=2 * n * t1 * t1,
        transcendentals=0,
        bytes_accessed=n * t1 * t1 * (in_item + out_item),
    )
    # Alias the logits buffer in place when dtypes match (f32 path): avoids a
    # second multi-GiB HBM allocation.
    aliases = {0: 0} if att.dtype == out_dtype else {}

    kernel = functools.partial(_alibi_add_kernel, n_heads=n_heads)
    out = pl.pallas_call(
        kernel,
        out_shape=jax.ShapeDtypeStruct((n, t1, t1), out_dtype),
        grid_spec=pltpu.PrefetchScalarGridSpec(
            num_scalar_prefetch=0,
            grid=grid,
            in_specs=[pl.BlockSpec((bn, tr, t1), lambda i, r: (i, r, 0))],
            out_specs=pl.BlockSpec((bn, tr, t1), lambda i, r: (i, r, 0)),
        ),
        compiler_params=pltpu.CompilerParams(
            # Every block is independent — lets v7x shard across its 2 TCs.
            dimension_semantics=("parallel", "parallel"),
            vmem_limit_bytes=vmem_limit,
        ),
        cost_estimate=cost,
        input_output_aliases=aliases,
    )(att)
    return out


def _reference_alibi_forward(attention, n_heads, max_seq_length):
    """Pure-JAX reference matching the PyTorch module semantics."""
    msl = max_seq_length
    x = jnp.arange(msl)[None, :]
    y = jnp.arange(msl)[:, None]
    relative = x - y                                        # (msl, msl) int
    increased = jnp.tile(relative[None], (n_heads, 1, 1))   # (H, msl, msl)
    scaler = 1.0 / (jnp.arange(1, n_heads + 1, dtype=jnp.float32) ** 2)
    scaler = scaler[:, None, None]
    alibi = increased.astype(jnp.float32) * scaler / 8.0    # (H, msl, msl)

    t1 = attention.shape[-1]
    reshaped = attention.reshape(-1, n_heads, t1, t1).astype(jnp.float32)
    return (reshaped + alibi[:, :t1, :t1]).reshape(-1, t1, t1)


if __name__ == "__main__":
    batch = 2
    n_heads = 4
    max_seq_length = 16
    seq = 8

    key = jax.random.PRNGKey(0)
    k1, k2 = jax.random.split(key)

    # attention logits of shape (batch * n_heads, T, T), as fed to forward()
    attention = jax.random.normal(
        k1, (batch * n_heads, seq, seq), dtype=jnp.float32)

    out = jax.block_until_ready(
        alibi_encoding_forward(attention, n_heads, max_seq_length))
    ref = _reference_alibi_forward(attention, n_heads, max_seq_length)
    assert out.shape == ref.shape, (out.shape, ref.shape)
    assert out.dtype == ref.dtype, (out.dtype, ref.dtype)
    assert jnp.allclose(out, ref, atol=1e-5, rtol=1e-5), "f32 mismatch vs reference"

    # bf16 input exercises the in-kernel cast path (no wrapper-side astype pass).
    att_bf16 = jax.random.normal(
        k2, (batch * n_heads, seq, seq), dtype=jnp.bfloat16)
    out2 = jax.block_until_ready(
        alibi_encoding_forward(att_bf16, n_heads, max_seq_length))
    ref2 = _reference_alibi_forward(att_bf16, n_heads, max_seq_length)
    assert out2.dtype == jnp.float32
    assert jnp.allclose(out2, ref2, atol=1e-5, rtol=1e-5), "bf16 mismatch vs reference"

    print("KERNEL_OK")
</pallas_src>

<mosaic_0001>
module attributes {stable_mosaic.version = 11 : i64} {
  func.func @_alibi_add_kernel(%arg0: i32, %arg1: i32, %arg2: memref<4x8x8xf32, #tpu.memory_space<vmem>>, %arg3: memref<4x8x8xf32, #tpu.memory_space<vmem>>) attributes {dimension_semantics = [#tpu.dimension_semantics<parallel>, #tpu.dimension_semantics<parallel>], iteration_bounds = array<i64: 2, 1>, scalar_prefetch = 0 : i64, scratch_operands = 0 : i64, tpu.core_type = #tpu.core_type<tc>, window_params = [{transform_indices = @transform_0, window_bounds = array<i64: 4, 8, 8>}, {transform_indices = @transform_1, window_bounds = array<i64: 4, 8, 8>}]} {
    %c4_i32 = arith.constant 4 : i32
    %0 = arith.muli %arg0, %c4_i32 : i32
    %c8_i32 = arith.constant 8 : i32
    %1 = arith.muli %arg1, %c8_i32 : i32
    %2 = tpu.iota {dimensions = array<i32: 0>} : vector<4x1x1xi32>
    %3 = vector.broadcast %0 : i32 to vector<4x1x1xi32>
    %4 = arith.addi %3, %2 : vector<4x1x1xi32>
    %c4_i32_0 = arith.constant 4 : i32
    %c0_i32 = arith.constant 0 : i32
    %5 = arith.cmpi eq, %c4_i32_0, %c0_i32 : i32
    %c1_i32 = arith.constant 1 : i32
    %6 = arith.select %5, %c1_i32, %c4_i32_0 : i32
    %7 = vector.broadcast %6 : i32 to vector<4x1x1xi32>
    %8 = arith.remsi %4, %7 : vector<4x1x1xi32>
    %c0_i32_1 = arith.constant 0 : i32
    %9 = vector.broadcast %c0_i32_1 : i32 to vector<4x1x1xi32>
    %10 = arith.cmpi ne, %8, %9 : vector<4x1x1xi32>
    %c0_i32_2 = arith.constant 0 : i32
    %11 = vector.broadcast %c0_i32_2 : i32 to vector<4x1x1xi32>
    %12 = arith.cmpi slt, %8, %11 : vector<4x1x1xi32>
    %c0_i32_3 = arith.constant 0 : i32
    %13 = arith.cmpi slt, %6, %c0_i32_3 : i32
    %14 = vector.broadcast %13 : i1 to vector<4x1x1xi1>
    %15 = vector.broadcast %14 : vector<4x1x1xi1> to vector<4x1x1xi1>
    %16 = arith.xori %12, %15 : vector<4x1x1xi1>
    %17 = arith.andi %16, %10 : vector<4x1x1xi1>
    %18 = vector.broadcast %6 : i32 to vector<4x1x1xi32>
    %19 = arith.addi %8, %18 : vector<4x1x1xi32>
    %20 = arith.select %17, %19, %8 : vector<4x1x1xi1>, vector<4x1x1xi32>
    %c1_i32_4 = arith.constant 1 : i32
    %21 = vector.broadcast %c1_i32_4 : i32 to vector<4x1x1xi32>
    %22 = arith.addi %20, %21 : vector<4x1x1xi32>
    %23 = arith.sitofp %22 : vector<4x1x1xi32> to vector<4x1x1xf32>
    %24 = arith.mulf %23, %23 : vector<4x1x1xf32>
    %cst = arith.constant 8.000000e+00 : f32
    %25 = vector.broadcast %cst : f32 to vector<4x1x1xf32>
    %26 = arith.mulf %24, %25 : vector<4x1x1xf32>
    %cst_5 = arith.constant 1.000000e+00 : f32
    %27 = vector.broadcast %cst_5 : f32 to vector<4x1x1xf32>
    %28 = arith.divf %27, %26 : vector<4x1x1xf32>
    %29 = tpu.iota {dimensions = array<i32: 1>} : vector<8x8xi32>
    %30 = tpu.iota {dimensions = array<i32: 0>} : vector<8x8xi32>
    %31 = vector.broadcast %1 : i32 to vector<8x8xi32>
    %32 = arith.addi %30, %31 : vector<8x8xi32>
    %33 = arith.subi %29, %32 : vector<8x8xi32>
    %34 = arith.sitofp %33 : vector<8x8xi32> to vector<8x8xf32>
    %c0 = arith.constant 0 : index
    %c0_6 = arith.constant 0 : index
    %c0_7 = arith.constant 0 : index
    %35 = vector.load %arg2[%c0, %c0_6, %c0_7] : memref<4x8x8xf32, #tpu.memory_space<vmem>>, vector<4x8x8xf32>
    %36 = vector.shape_cast %34 : vector<8x8xf32> to vector<1x8x8xf32>
    %37 = vector.broadcast %36 : vector<1x8x8xf32> to vector<4x8x8xf32>
    %38 = vector.broadcast %28 : vector<4x1x1xf32> to vector<4x8x8xf32>
    %39 = arith.mulf %37, %38 : vector<4x8x8xf32>
    %40 = arith.addf %35, %39 : vector<4x8x8xf32>
    %c0_8 = arith.constant 0 : index
    %c0_9 = arith.constant 0 : index
    %c0_10 = arith.constant 0 : index
    %41 = vector.load %arg3[%c0_8, %c0_9, %c0_10] : memref<4x8x8xf32, #tpu.memory_space<vmem>>, vector<4x8x8xf32>
    tpu.vector_store %arg3[%c0_8, %c0_9, %c0_10], %40 {strides = array<i32>} : memref<4x8x8xf32, #tpu.memory_space<vmem>>, vector<4x8x8xf32>,
    return
  }
  func.func @transform_0(%arg0: i32, %arg1: i32) -> (i32, i32, i32) {
    %c0_i32 = arith.constant 0 : i32
    %c0_i32_0 = arith.constant 0 : i32
    return %arg0, %arg1, %c0_i32 : i32, i32, i32
  }
  func.func @transform_1(%arg0: i32, %arg1: i32) -> (i32, i32, i32) {
    %c0_i32 = arith.constant 0 : i32
    %c0_i32_0 = arith.constant 0 : i32
    return %arg0, %arg1, %c0_i32 : i32, i32, i32
  }
}

</mosaic_0001>

<llo_original>
// kernel: tpu_custom_call.1
$region0: #{tpu_custom_call.1}
  #allocation0 [shape = 'u32[]', space=smem, size = 0x4, offset = 0x4, fixed_abs, tag = 'smem constant byte address 0x4 - core index']
  #allocation1 [shape = 'u32[144,128]{1,0:T(1,128)}', space=vmem, size = 0x12000, scoped, tag = 'internal scratch']
  %s0 = inlined_call_operand.hbm [shape: f32[8,8,8], index: 0, kind: input, shape index: {}, may-alias: {0,1}]
  %s1 = inlined_call_operand.hbm [shape: f32[8,8,8], index: 1, kind: output, shape index: {}, may-alias: {0,1}]
  %s2 = sld [smem:[#allocation0]]
  $region41: #{tpu_custom_call.1} parent=0
    _
  %s4 = ssub.s32 1, %s2
  %s5 = scalar_select 0, %s4, %s2
  $region1: #{tpu_custom_call.1} parent=0
    #allocation2 [shape = 'u8[32768]{0}', space=vmem, size = 0x8000, scoped, tag = 'input window, operand 0']
    #allocation3 [shape = 's32[2]{0}', space=sflag, size = 0x8, scoped, tag = 'scoped memory for tpu_custom_call.1']
    #allocation4 [shape = 's32[2]{0}', space=sflag, size = 0x8, scoped, tag = 'scoped memory for tpu_custom_call.1']
    #allocation5 [shape = 'u8[32768]{0}', space=vmem, size = 0x8000, scoped, tag = 'output window, operand 0']
    %6 = vsyncpa [#allocation3], 0
    %s7 = scalar_lea.sflag [#allocation3], 1
    %8 = vsyncpa %s7, 0
    %9 = vsyncpa [#allocation4], 0
    %s10 = scalar_lea.sflag [#allocation4], 1
    %11 = vsyncpa %s10, 0
    loop: start=0, step=1, limit=4
    $region2: #{tpu_custom_call.1} parent=1 // loop_pre_header
      _
    $region3: #{tpu_custom_call.1} parent=1 // loop_header
      %s13 = sphi 0, %s17
      %p14 = scmp.ge.s32.totalorder %s13, 4
      %s20 = sphi 0, %s32
      %s21 = sphi 0, %s28
      %s22 = sphi 0, %s20
      %s23 = sphi 0, %s21
      %s24 = sphi 0, %s22
      %s25 = sphi 0, %s23
      %s37 = sphi 0, %s39
      %s40 = sphi 0, %s37
      %s41 = sphi 0, %s40
      %s57 = sphi 0, %s41
      %s65 = sphi 0, %s67
      %s68 = sphi 0, %s65
      %s69 = sphi 0, %s68
      %s85 = sphi 0, %s69
    $region4: #{tpu_custom_call.1} parent=1 // loop_header_branch
      %16 = sbr.rel (%p14) target = $region8
    $region5: #{tpu_custom_call.1} parent=1 // loop_body
      %s18 = ssub.s32 %s13, 1
      %s19 = ssub.s32 %s13, 2
      %s26 = sadd.s32 1, %s21
      %p27 = scmp.ge.s32.totalorder %s26, 1
      %s28 = scalar_select %p27, 0, %s26
      %s29 = sadd.s32 1, %s20
      %s30 = scalar_select %p27, %s29, %s20
      %p31 = scmp.ge.s32.totalorder %s30, 2
      %s32 = scalar_select %p31, 0, %s30
      %s33 = ssub.s32 %s20, %s32
      %s34 = ssub.s32 %s21, %s28
      %s35 = sor.u32 %s33, %s34
      %p36 = scmp.eq.s32.totalorder %s35, 0
      %s38 = sadd.s32 %s37, 1
      %s39 = scalar_select %p36, %s37, %s38
      %p42 = pneg %p36
      %p43 = scmp.eq.s32.totalorder %s13, 1
      %p44 = por %p42, %p43
      %p45 = scmp.ne.s32.totalorder %s37, %s40
      %p46 = scmp.eq.s32.totalorder %s13, 0
      %p47 = por %p45, %p46
      %p48 = scmp.ne.s32.totalorder %s37, %s40
      %p49 = scmp.eq.s32.totalorder %s18, 1
      %p50 = por %p48, %p49
      %p51 = scmp.ne.s32.totalorder %s40, %s41
      %p52 = scmp.eq.s32.totalorder %s18, 0
      %p53 = por %p51, %p52
      %p54 = scmp.ne.s32.totalorder %s40, %s41
      %p55 = scmp.eq.s32.totalorder %s19, 1
      %p56 = por %p54, %p55
      %p58 = scmp.ne.s32.totalorder %s41, %s57
      %p59 = scmp.eq.s32.totalorder %s19, 0
      %p60 = por %p58, %p59
      %s61 = ssub.s32 %s20, %s32
      %s62 = ssub.s32 %s21, %s28
      %s63 = sor.u32 %s61, %s62
      %p64 = scmp.eq.s32.totalorder %s63, 0
      %s66 = sadd.s32 %s65, 1
      %s67 = scalar_select %p64, %s65, %s66
      %p70 = pneg %p64
      %p71 = scmp.eq.s32.totalorder %s13, 1
      %p72 = por %p70, %p71
      %p73 = scmp.ne.s32.totalorder %s65, %s68
      %p74 = scmp.eq.s32.totalorder %s13, 0
      %p75 = por %p73, %p74
      %p76 = scmp.ne.s32.totalorder %s65, %s68
      %p77 = scmp.eq.s32.totalorder %s18, 1
      %p78 = por %p76, %p77
      %p79 = scmp.ne.s32.totalorder %s68, %s69
      %p80 = scmp.eq.s32.totalorder %s18, 0
      %p81 = por %p79, %p80
      %p82 = scmp.ne.s32.totalorder %s68, %s69
      %p83 = scmp.eq.s32.totalorder %s19, 1
      %p84 = por %p82, %p83
      %p86 = scmp.ne.s32.totalorder %s69, %s85
      %p87 = scmp.eq.s32.totalorder %s19, 0
      %p88 = por %p86, %p87
      %p89 = scmp.le.s32.totalorder 1, %s13
      %p90 = scmp.lt.s32.totalorder %s13, 3
      %p91 = pnand %p89, %p90
      %p92 = pneg %p91
      // Predicated region
      $region9: #{tpu_custom_call.1} parent=5 // pred_check
        _
      $region10: #{tpu_custom_call.1} parent=5 // pred_check_branch
        %94 = sbr.rel (%p91) target = $region12
      $region11: #{tpu_custom_call.1} parent=5 // pred_region
        %s95 = ssub.s32 %s13, 1
      $region12: #{tpu_custom_call.1} parent=5 // pred_fallthru
        _
      %p96 = scmp.lt.s32.totalorder %s13, 2
      // Predicated region
      $region13: #{tpu_custom_call.1} parent=5 // pred_check
        %p97 = pneg %p96
      $region14: #{tpu_custom_call.1} parent=5 // pred_check_branch
        %99 = sbr.rel (%p97) target = $region16
      $region15: #{tpu_custom_call.1} parent=5 // pred_region
        // Predicated region
        $region17: #{tpu_custom_call.1} parent=15 // pred_check
          %p100 = pneg %p47
        $region18: #{tpu_custom_call.1} parent=15 // pred_check_branch
          %102 = sbr.rel (%p100) target = $region20
        $region19: #{tpu_custom_call.1} parent=15 // pred_region
          %s103 = sand.u32 %s37, 1
          %s104 = scalar_lea.sflag [#allocation3], %s103
          %s105 = sand.u32 %s37, 1
          %s106 = smul.addr %s105, 32
          %s107 = scalar_lea.vmem [#allocation2], %s106
          %s108 = smul.u32 4, %s20
          %s110 = ssub.s32 512, 512
          %111 = vsyncadd %s104, %s110
          %s112 = sadd.s32 %s21, %s108
          %s113 = smul.addr %s112, 128
          %s114 = scalar_lea.hbm %s0, %s113
          %s115 = sshll.u32 %s107, 4
          %s116 = int_to_ptr.vmem [resolvable:$true] %s115
          %121 = dma.hbm_to_vmem [thread:$0]  %s114, 512, %s116, %s104, 128, 128, 8
        $region20: #{tpu_custom_call.1} parent=15 // pred_fallthru
          _
      $region16: #{tpu_custom_call.1} parent=5 // pred_fallthru
        _
      %p122 = scmp.le.s32.totalorder 1, %s13
      %p123 = scmp.lt.s32.totalorder %s13, 3
      %p124 = pnand %p122, %p123
      %p125 = pneg %p124
      // Predicated region
      $region21: #{tpu_custom_call.1} parent=5 // pred_check
        _
      $region22: #{tpu_custom_call.1} parent=5 // pred_check_branch
        %127 = sbr.rel (%p124) target = $region24
      $region23: #{tpu_custom_call.1} parent=5 // pred_region
        %s128 = ssub.s32 %s13, 1
        %s129 = sand.u32 %s40, 1
        %s130 = scalar_lea.sflag [#allocation3], %s129
        %s131 = sand.u32 %s40, 1
        %s132 = smul.addr %s131, 32
        %s133 = scalar_lea.vmem [#allocation2], %s132
        // Predicated region
        $region25: #{tpu_custom_call.1} parent=23 // pred_check
          %p134 = pneg %p53
        $region26: #{tpu_custom_call.1} parent=23 // pred_check_branch
          %136 = sbr.rel (%p134) target = $region28
        $region27: #{tpu_custom_call.1} parent=23 // pred_region
          %137 = dma.done %s130, 512
        $region28: #{tpu_custom_call.1} parent=23 // pred_fallthru
          _
        %s138 = sand.u32 %s40, 1
        %s139 = scalar_lea.sflag [#allocation3], %s138
        %s140 = sand.u32 %s40, 1
        %s141 = smul.addr %s140, 32
        %s142 = scalar_lea.vmem [#allocation2], %s141
        %p143 = pneg %p53
        %p144 = pneg %p50
        %p145 = pneg %p81
        %p146 = pneg %p78
        %s147 = sand.u32 %s68, 1
        %s148 = scalar_lea.sflag [#allocation4], %s147
        %s149 = sand.u32 %s68, 1
        %s150 = smul.addr %s149, 32
        %s151 = scalar_lea.vmem [#allocation5], %s150
        %s152 = smul.u32 4, %s22
        %s153 = smul.u32 4, %s22
        %s154 = smul.u32 %s22, 4
        %s155 = smul.u32 %s23, 8
        %v156 = vstv %s154
        %v157 = vadd.s32 %v156, 1
        %v158 = vadd.s32 %v156, 2
        %v159 = vadd.s32 %v156, 3
        %vm160 = vcmp.lt.s32.totalorder %v156, 0
        %v161 = vsub.s32 0, %v156
        %v162 = vsel %vm160, %v161, %v156
        %v163 = vshrl.u32 %v162, 2
        %v164 = vand.u32 %v162, 3
        %v165 = vsub.s32 0, %v164
        %v166 = vsel %vm160, %v165, %v164
        %vm167 = vcmp.lt.s32.totalorder %v157, 0
        %v168 = vsub.s32 0, %v157
        %v169 = vsel %vm167, %v168, %v157
        %v170 = vshrl.u32 %v169, 2
        %v171 = vand.u32 %v169, 3
        %v172 = vsub.s32 0, %v171
        %v173 = vsel %vm167, %v172, %v171
        %vm174 = vcmp.lt.s32.totalorder %v158, 0
        %v175 = vsub.s32 0, %v158
        %v176 = vsel %vm174, %v175, %v158
        %v177 = vshrl.u32 %v176, 2
        %v178 = vand.u32 %v176, 3
        %v179 = vsub.s32 0, %v178
        %v180 = vsel %vm174, %v179, %v178
        %vm181 = vcmp.lt.s32.totalorder %v159, 0
        %v182 = vsub.s32 0, %v159
        %v183 = vsel %vm181, %v182, %v159
        %v184 = vshrl.u32 %v183, 2
        %v185 = vand.u32 %v183, 3
        %v186 = vsub.s32 0, %v185
        %v187 = vsel %vm181, %v186, %v185
        %vm188 = vcmp.ne.s32.totalorder %v166, 0
        %vm189 = vcmp.ne.s32.totalorder %v173, 0
        %vm190 = vcmp.ne.s32.totalorder %v180, 0
        %vm191 = vcmp.ne.s32.totalorder %v187, 0
        %vm192 = vcmp.lt.s32.totalorder %v166, 0
        %vm193 = vcmp.lt.s32.totalorder %v173, 0
        %vm194 = vcmp.lt.s32.totalorder %v180, 0
        %vm195 = vcmp.lt.s32.totalorder %v187, 0
        %vm196 = vmand %vm192, %vm188
        %vm197 = vmand %vm193, %vm189
        %vm198 = vmand %vm194, %vm190
        %vm199 = vmand %vm195, %vm191
        %v200 = vadd.s32 %v166, 4
        %v201 = vadd.s32 %v173, 4
        %v202 = vadd.s32 %v180, 4
        %v203 = vadd.s32 %v187, 4
        %v204 = vsel %vm196, %v200, %v166
        %v205 = vsel %vm197, %v201, %v173
        %v206 = vsel %vm198, %v202, %v180
        %v207 = vsel %vm199, %v203, %v187
        %v208 = vadd.s32 %v204, 1
        %v209 = vadd.s32 %v205, 1
        %v210 = vadd.s32 %v206, 1
        %v211 = vadd.s32 %v207, 1
        %v212 = vcvt.s32.f32 %v208
        %v213 = vcvt.s32.f32 %v209
        %v214 = vcvt.s32.f32 %v210
        %v215 = vcvt.s32.f32 %v211
        %v216 = vmul.f32 %v212, %v212
        %v217 = vmul.f32 %v213, %v213
        %v218 = vmul.f32 %v214, %v214
        %v219 = vmul.f32 %v215, %v215
        %v220 = vmul.f32 %v216, 8.0
        %v221 = vmul.f32 %v217, 8.0
        %v222 = vmul.f32 %v218, 8.0
        %v223 = vmul.f32 %v219, 8.0
        %v224 = vrcp.pop %v220
        %v225 = vmul.f32 1.0, %v224
        %v226 = vrcp.pop %v221
        %v227 = vmul.f32 1.0, %v226
        %v228 = vrcp.pop %v222
        %v229 = vmul.f32 1.0, %v228
        %v230 = vrcp.pop %v223
        %v231 = vmul.f32 1.0, %v230
        %v232 = vlaneseq
        %v233 = vand.u32 %v232, 127
        %v234 = vlaneseq
        %v235 = vshrl.u32 %v234, 7
        %v236 = vstv %s155
        %v237 = vadd.s32 %v235, %v236
        %v238 = vsub.s32 %v233, %v237
        %v239 = vcvt.s32.f32 %v238
        %v240 = vld [vmem:[%s133] sm:$0xff]
        %v241 = vld [vmem:[%s133 + $0x8] sm:$0xff]
        %v242 = vld [vmem:[%s133 + $0x10] sm:$0xff]
        %v243 = vld [vmem:[%s133 + $0x18] sm:$0xff]
        %v244 = vmul.f32 %v239, %v225
        %v245 = vmul.f32 %v239, %v227
        %v246 = vmul.f32 %v239, %v229
        %v247 = vmul.f32 %v239, %v231
        %v248 = vadd.f32 %v240, %v244
        %v249 = vadd.f32 %v241, %v245
        %v250 = vadd.f32 %v242, %v246
        %v251 = vadd.f32 %v243, %v247
        %vm252 = vcmask 64512
        %253 = vst.msk [vmem:[%s151] sm:$0xff] %vm252, %v248
        %254 = vst.msk [vmem:[%s151 + $0x8] sm:$0xff] %vm252, %v249
        %255 = vst.msk [vmem:[%s151 + $0x10] sm:$0xff] %vm252, %v250
        %256 = vst.msk [vmem:[%s151 + $0x18] sm:$0xff] %vm252, %v251
        %s257 = sand.u32 %s68, 1
        %s258 = scalar_lea.sflag [#allocation4], %s257
        %s259 = sand.u32 %s68, 1
        %s260 = smul.addr %s259, 32
        %s261 = scalar_lea.vmem [#allocation5], %s260
        // Predicated region
        $region29: #{tpu_custom_call.1} parent=23 // pred_check
          %p262 = pneg %p78
        $region30: #{tpu_custom_call.1} parent=23 // pred_check_branch
          %264 = sbr.rel (%p262) target = $region32
        $region31: #{tpu_custom_call.1} parent=23 // pred_region
          %s265 = smul.u32 4, %s22
          %s267 = ssub.s32 512, 512
          %268 = vsyncadd %s258, %s267
          %s269 = sadd.s32 %s23, %s265
          %s270 = smul.addr %s269, 128
          %s271 = scalar_lea.hbm %s1, %s270
          %s272 = sshll.u32 %s261, 4
          %s273 = int_to_ptr.vmem [resolvable:$true] %s272
          %278 = dma.vmem_to_hbm [thread:$0]  %s273, 512, %s271, %s258, 128, 128, 8
        $region32: #{tpu_custom_call.1} parent=23 // pred_fallthru
          _
      $region24: #{tpu_custom_call.1} parent=5 // pred_fallthru
        _
      %p279 = scmp.le.s32.totalorder 2, %s13
      // Predicated region
      $region33: #{tpu_custom_call.1} parent=5 // pred_check
        %p280 = pneg %p279
      $region34: #{tpu_custom_call.1} parent=5 // pred_check_branch
        %282 = sbr.rel (%p280) target = $region36
      $region35: #{tpu_custom_call.1} parent=5 // pred_region
        %s283 = ssub.s32 %s13, 2
        // Predicated region
        $region37: #{tpu_custom_call.1} parent=35 // pred_check
          %p284 = pneg %p84
        $region38: #{tpu_custom_call.1} parent=35 // pred_check_branch
          %286 = sbr.rel (%p284) target = $region40
        $region39: #{tpu_custom_call.1} parent=35 // pred_region
          %s287 = sand.u32 %s69, 1
          %s288 = scalar_lea.sflag [#allocation4], %s287
          %s289 = sand.u32 %s69, 1
          %s290 = smul.addr %s289, 32
          %s291 = scalar_lea.vmem [#allocation5], %s290
          %292 = dma.done %s288, 512
        $region40: #{tpu_custom_call.1} parent=35 // pred_fallthru
          _
      $region36: #{tpu_custom_call.1} parent=5 // pred_fallthru
        _
    $region6: #{tpu_custom_call.1} parent=1 // loop_footer
      %s17 = sadd.s32 1, %s13
    $region7: #{tpu_custom_call.1} parent=1 // loop_footer_branch
      %12 = sbr.rel target = $region3
    $region8: #{tpu_custom_call.1} parent=1 // loop_exit
      _
    %293 = vsyncpa [#allocation3], 1
    %s294 = scalar_lea.sflag [#allocation3], 1
    %295 = vsyncpa %s294, 1
    %296 = vsyncpa [#allocation4], 1
    %s297 = scalar_lea.sflag [#allocation4], 1
    %298 = vsyncpa %s297, 1

</llo_original>
